<compile_context>
chip_gen: v5e
topology: v5e:2x2
jax: 0.10.0
libtpu: 0.0.40
codegen_flags: <defaults>
</compile_context>

<pallas_src>
import functools

import numpy as np
import jax
import jax.numpy as jnp
from jax.experimental import pallas as pl
from jax.experimental.pallas import tpu as pltpu


def _fft_loss_kernel(x_ref, y_ref, cw_ref, swn_ref, ch_ref, sh_ref, chms_ref,
                     out_ref, acc_ref, *, use_vreg_acc):
    """One grid step = TB super-images; accumulate sum(|FFT2(x - y)|)."""
    i = pl.program_id(1)  # accumulation ("arbitrary") axis

    @pl.when(i == 0)
    def _():
        if use_vreg_acc:
            acc_ref[...] = jnp.zeros_like(acc_ref)
        else:
            acc_ref[0] = jnp.float32(0.0)

    tb, hh, ww = x_ref.shape  # hh = q*H, ww = p*W

    # Fused subtraction (VPU; free under DMA/MXU slots).
    d = x_ref[...] - y_ref[...]  # (TB, hh, ww)

    # ---- Row DFT (along lanes): T = D @ (C_W - i*S_W), block-diag, D real --
    d2 = d.reshape(tb * hh, ww)
    a = jnp.dot(d2, cw_ref[...], preferred_element_type=jnp.float32)   # Re(T)
    b = jnp.dot(d2, swn_ref[...], preferred_element_type=jnp.float32)  # Im(T), -S from host

    # ---- Column DFT as one tall 2-D matmul via transpose -------------------
    # (F_H @ T)^T = T^T @ F_H  (F_H symmetric).  Magnitude is orientation-
    # invariant, so no transpose back; the XLU transposes hide under MXU work.
    at = jnp.transpose(a.reshape(tb, hh, ww), (0, 2, 1)).reshape(tb * ww, hh)
    bt = jnp.transpose(b.reshape(tb, hh, ww), (0, 2, 1)).reshape(tb * ww, hh)

    # Karatsuba 3-mult complex matmul (weight-stationary DFT matrices):
    #   m1 = At@C, m2 = Bt@S, m3 = (At+Bt)@(C-S)
    #   Re(R^T) = m1 + m2 ,  Im(R^T) = m3 - m1 + m2
    m1 = jnp.dot(at, ch_ref[...], preferred_element_type=jnp.float32)
    m2 = jnp.dot(bt, sh_ref[...], preferred_element_type=jnp.float32)
    m3 = jnp.dot(at + bt, chms_ref[...], preferred_element_type=jnp.float32)
    r_re = m1 + m2
    r_im = m3 - m1 + m2

    mag = jnp.sqrt(r_re * r_re + r_im * r_im)  # (TB*ww, hh)

    # Deferred reduction: per-step partial is a VPU-only add into a small
    # accumulator (no full-tile VMEM load/store per step).
    if use_vreg_acc:
        acc_ref[...] += mag.reshape(-1, 8, hh).sum(axis=0)
    else:
        acc_ref[0] += jnp.sum(mag)

    @pl.when(i == pl.num_programs(1) - 1)
    def _():
        if use_vreg_acc:
            out_ref[0, 0] = jnp.sum(acc_ref[...])
        else:
            out_ref[0, 0] = acc_ref[0]


def _dft_cos_sin(n):
    """cos/sin DFT matrices; angle from exact int64 (j*k) mod n (no overflow)."""
    k = np.arange(n, dtype=np.int64)
    kk = (k[:, None] * k[None, :]) % n
    ang = kk.astype(np.float64) * (2.0 * np.pi / float(n))
    return np.cos(ang), np.sin(ang)


def _blockdiag(mat, copies):
    if copies == 1:
        return mat
    return np.kron(np.eye(copies, dtype=mat.dtype), mat)


def _largest_divisor_leq(n, cap):
    cap = max(1, min(n, cap))
    for d in range(cap, 0, -1):
        if n % d == 0:
            return d
    return 1


def fft_loss(x, y):
    """JAX/Pallas equivalent of fftLoss.forward(x, y) -> scalar float32."""
    assert x.shape == y.shape and x.ndim >= 2
    H, W = int(x.shape[-2]), int(x.shape[-1])
    B = 1
    for s in x.shape[:-2]:
        B *= int(s)
    B = max(B, 1)

    x3 = x.reshape(B, H, W).astype(jnp.float32)
    y3 = y.reshape(B, H, W).astype(jnp.float32)

    # ---- lane/sublane packing of small images into "super images" ----------
    # p images along lanes (width), q along sublanes (height); block-diagonal
    # DFT matrices make the super-image 2-D DFT equal the per-image DFTs, and
    # |.| is summed anyway, so the loss is unchanged.  Gives lane-dense vregs,
    # unmasked stores and full MXU contraction depth for small H, W.
    LANE_TARGET = 128
    p = _largest_divisor_leq(B, max(1, LANE_TARGET // W)) if W < LANE_TARGET else 1
    q = _largest_divisor_leq(B // p, max(1, LANE_TARGET // H)) if H < LANE_TARGET else 1
    Bg = B // (p * q)
    HH, WW = q * H, p * W

    def pack(t):
        t = t.reshape(Bg, q, p, H, W)
        t = jnp.transpose(t, (0, 1, 3, 2, 4))  # (Bg, q, H, p, W)
        return t.reshape(Bg, HH, WW)

    xp = pack(x3)
    yp = pack(y3)

    # ---- block-diagonal DFT constants ---------------------------------------
    cw_np, sw_np = _dft_cos_sin(W)
    ch_np, sh_np = _dft_cos_sin(H)
    cw = jnp.asarray(_blockdiag(cw_np, p), jnp.float32)
    swn = jnp.asarray(_blockdiag(-sw_np, p), jnp.float32)   # -S_W (host-side negation)
    ch = jnp.asarray(_blockdiag(ch_np, q), jnp.float32)
    sh = jnp.asarray(_blockdiag(sh_np, q), jnp.float32)
    chms = jnp.asarray(_blockdiag(ch_np - sh_np, q), jnp.float32)
    # TODO(synk): for very large H/W (v7x 64 MiB VMEM) drop `chms` (skip
    # Karatsuba) and/or fold rfft symmetry into F_W to shrink the constants.

    # ---- generation-aware VMEM budgeting ------------------------------------
    try:
        vmem_cap = int(getattr(pltpu.get_tpu_info(), "vmem_capacity_bytes"))
    except Exception:
        vmem_cap = 64 * 1024 * 1024  # conservative fallback (v7x per-TC)
    vmem_limit = min(vmem_cap * 3 // 4, 112 * 1024 * 1024)
    const_bytes = 4 * (2 * WW * WW + 3 * HH * HH)
    sup_bytes = 4 * HH * WW
    # per super-image: 2x double-buffered x + y input tiles (4x) plus ~12 live
    # f32 intermediates (d, a, b, at, bt, at+bt, m1..m3, re, im, mag).
    per_sup = 16 * sup_bytes
    budget = int(vmem_limit * 0.8) - const_bytes - 4 * 8 * HH
    tb = 1
    if budget > per_sup:
        tb = _largest_divisor_leq(Bg, budget // per_sup)

    steps_total = Bg // tb
    # v7x: split the batch across both TensorCores via a parallel grid axis;
    # harmless (sequential) on single-core v5e/v6e.
    ncores = 2 if (steps_total >= 2 and steps_total % 2 == 0) else 1
    spc = steps_total // ncores  # steps per core

    use_vreg_acc = ((tb * WW) % 8 == 0)
    acc_spec = (pltpu.VMEM((8, HH), jnp.float32) if use_vreg_acc
                else pltpu.SMEM((1,), jnp.float32))

    kernel = functools.partial(_fft_loss_kernel, use_vreg_acc=use_vreg_acc)

    partials = pl.pallas_call(
        kernel,
        out_shape=jax.ShapeDtypeStruct((ncores, 1), jnp.float32),
        grid_spec=pltpu.PrefetchScalarGridSpec(
            num_scalar_prefetch=0,
            grid=(ncores, spc),
            in_specs=[
                pl.BlockSpec((tb, HH, WW), lambda c, i: (c * spc + i, 0, 0)),  # x
                pl.BlockSpec((tb, HH, WW), lambda c, i: (c * spc + i, 0, 0)),  # y
                # Grid-invariant DFT matrices: whole-array, single-buffered VMEM.
                pl.BlockSpec(memory_space=pltpu.MemorySpace.VMEM),  # blockdiag C_W
                pl.BlockSpec(memory_space=pltpu.MemorySpace.VMEM),  # blockdiag -S_W
                pl.BlockSpec(memory_space=pltpu.MemorySpace.VMEM),  # blockdiag C_H
                pl.BlockSpec(memory_space=pltpu.MemorySpace.VMEM),  # blockdiag S_H
                pl.BlockSpec(memory_space=pltpu.MemorySpace.VMEM),  # blockdiag C_H - S_H
            ],
            out_specs=pl.BlockSpec((1, 1), lambda c, i: (c, 0),
                                   memory_space=pltpu.MemorySpace.SMEM),
            scratch_shapes=[acc_spec],
        ),
        compiler_params=pltpu.CompilerParams(
            dimension_semantics=("parallel", "arbitrary"),
            vmem_limit_bytes=int(vmem_limit),
        ),
    )(xp, yp, cw, swn, ch, sh, chms)

    return jnp.sum(partials) / jnp.float32(B * H * W)


if __name__ == "__main__":
    key = jax.random.PRNGKey(0)
    kx, ky = jax.random.split(key)
    x = jax.random.normal(kx, (2, 4, 16, 16), dtype=jnp.float32)
    y = jax.random.normal(ky, (2, 4, 16, 16), dtype=jnp.float32)

    loss = fft_loss(x, y)
    loss = jax.block_until_ready(loss)

    # Reference check against jnp.fft (mirrors the PyTorch semantics).
    ref = jnp.mean(jnp.abs(jnp.fft.fft2(x) - jnp.fft.fft2(y)))
    assert jnp.allclose(loss, ref, rtol=1e-3, atol=1e-3), (float(loss), float(ref))

    print("KERNEL_OK")
</pallas_src>

<mosaic_0001>
module attributes {stable_mosaic.version = 11 : i64} {
  func.func @_fft_loss_kernel(%arg0: i32, %arg1: i32, %arg2: memref<1x16x128xf32, #tpu.memory_space<vmem>>, %arg3: memref<1x16x128xf32, #tpu.memory_space<vmem>>, %arg4: memref<128x128xf32, #tpu.memory_space<vmem>>, %arg5: memref<128x128xf32, #tpu.memory_space<vmem>>, %arg6: memref<16x16xf32, #tpu.memory_space<vmem>>, %arg7: memref<16x16xf32, #tpu.memory_space<vmem>>, %arg8: memref<16x16xf32, #tpu.memory_space<vmem>>, %arg9: memref<1x1xf32, #tpu.memory_space<smem>>, %arg10: memref<8x16xf32, #tpu.memory_space<vmem>>) attributes {dimension_semantics = [#tpu.dimension_semantics<parallel>, #tpu.dimension_semantics<arbitrary>], iteration_bounds = array<i64: 1, 1>, scalar_prefetch = 0 : i64, scratch_operands = 1 : i64, tpu.core_type = #tpu.core_type<tc>, window_params = [{transform_indices = @transform_0, window_bounds = array<i64: 1, 16, 128>}, {transform_indices = @transform_1, window_bounds = array<i64: 1, 16, 128>}, {pipeline_mode = #tpu.pipeline_mode<synchronous>, transform_indices = @transform_2, window_bounds = array<i64: 128, 128>}, {pipeline_mode = #tpu.pipeline_mode<synchronous>, transform_indices = @transform_3, window_bounds = array<i64: 128, 128>}, {pipeline_mode = #tpu.pipeline_mode<synchronous>, transform_indices = @transform_4, window_bounds = array<i64: 16, 16>}, {pipeline_mode = #tpu.pipeline_mode<synchronous>, transform_indices = @transform_5, window_bounds = array<i64: 16, 16>}, {pipeline_mode = #tpu.pipeline_mode<synchronous>, transform_indices = @transform_6, window_bounds = array<i64: 16, 16>}, {transform_indices = @transform_7, window_bounds = array<i64: 1, 1>}]} {
    %c0_i32 = arith.constant 0 : i32
    %0 = arith.cmpi eq, %arg1, %c0_i32 : i32
    %1 = arith.extui %0 : i1 to i32
    %c0_i32_0 = arith.constant 0 : i32
    %2 = arith.cmpi ne, %1, %c0_i32_0 : i32
    scf.if %2 {
      %cst_27 = arith.constant 0.000000e+00 : f32
      %39 = vector.broadcast %cst_27 : f32 to vector<8x16xf32>
      %c0_28 = arith.constant 0 : index
      %c0_29 = arith.constant 0 : index
      %40 = vector.load %arg10[%c0_28, %c0_29] : memref<8x16xf32, #tpu.memory_space<vmem>>, vector<8x16xf32>
      tpu.vector_store %arg10[%c0_28, %c0_29], %39 {strides = array<i32>} : memref<8x16xf32, #tpu.memory_space<vmem>>, vector<8x16xf32>,
    } else {
    }
    %c0 = arith.constant 0 : index
    %c0_1 = arith.constant 0 : index
    %c0_2 = arith.constant 0 : index
    %3 = vector.load %arg2[%c0, %c0_1, %c0_2] : memref<1x16x128xf32, #tpu.memory_space<vmem>>, vector<1x16x128xf32>
    %c0_3 = arith.constant 0 : index
    %c0_4 = arith.constant 0 : index
    %c0_5 = arith.constant 0 : index
    %4 = vector.load %arg3[%c0_3, %c0_4, %c0_5] : memref<1x16x128xf32, #tpu.memory_space<vmem>>, vector<1x16x128xf32>
    %5 = arith.subf %3, %4 : vector<1x16x128xf32>
    %6 = vector.shape_cast %5 : vector<1x16x128xf32> to vector<16x128xf32>
    %c0_6 = arith.constant 0 : index
    %c0_7 = arith.constant 0 : index
    %7 = vector.load %arg4[%c0_6, %c0_7] : memref<128x128xf32, #tpu.memory_space<vmem>>, vector<128x128xf32>
    %cst = arith.constant dense<0.000000e+00> : vector<16x128xf32>
    %8 = tpu.matmul %6, %7, %cst {dimension_numbers = #tpu.dot_dimension_numbers<[1], [0], [0], [1], [0, 0, 1, 1], [], []>} : vector<16x128xf32>, vector<128x128xf32>, vector<16x128xf32> -> vector<16x128xf32>
    %c0_8 = arith.constant 0 : index
    %c0_9 = arith.constant 0 : index
    %9 = vector.load %arg5[%c0_8, %c0_9] : memref<128x128xf32, #tpu.memory_space<vmem>>, vector<128x128xf32>
    %cst_10 = arith.constant dense<0.000000e+00> : vector<16x128xf32>
    %10 = tpu.matmul %6, %9, %cst_10 {dimension_numbers = #tpu.dot_dimension_numbers<[1], [0], [0], [1], [0, 0, 1, 1], [], []>} : vector<16x128xf32>, vector<128x128xf32>, vector<16x128xf32> -> vector<16x128xf32>
    %11 = vector.shape_cast %8 : vector<16x128xf32> to vector<1x16x128xf32>
    %12 = tpu.transpose %11, [0, 2, 1] : vector<1x16x128xf32> -> vector<1x128x16xf32>
    %13 = vector.shape_cast %12 : vector<1x128x16xf32> to vector<128x16xf32>
    %14 = vector.shape_cast %10 : vector<16x128xf32> to vector<1x16x128xf32>
    %15 = tpu.transpose %14, [0, 2, 1] : vector<1x16x128xf32> -> vector<1x128x16xf32>
    %16 = vector.shape_cast %15 : vector<1x128x16xf32> to vector<128x16xf32>
    %c0_11 = arith.constant 0 : index
    %c0_12 = arith.constant 0 : index
    %17 = vector.load %arg6[%c0_11, %c0_12] : memref<16x16xf32, #tpu.memory_space<vmem>>, vector<16x16xf32>
    %cst_13 = arith.constant dense<0.000000e+00> : vector<128x16xf32>
    %18 = tpu.matmul %13, %17, %cst_13 {dimension_numbers = #tpu.dot_dimension_numbers<[1], [0], [0], [1], [0, 0, 1, 1], [], []>} : vector<128x16xf32>, vector<16x16xf32>, vector<128x16xf32> -> vector<128x16xf32>
    %c0_14 = arith.constant 0 : index
    %c0_15 = arith.constant 0 : index
    %19 = vector.load %arg7[%c0_14, %c0_15] : memref<16x16xf32, #tpu.memory_space<vmem>>, vector<16x16xf32>
    %cst_16 = arith.constant dense<0.000000e+00> : vector<128x16xf32>
    %20 = tpu.matmul %16, %19, %cst_16 {dimension_numbers = #tpu.dot_dimension_numbers<[1], [0], [0], [1], [0, 0, 1, 1], [], []>} : vector<128x16xf32>, vector<16x16xf32>, vector<128x16xf32> -> vector<128x16xf32>
    %21 = arith.addf %13, %16 : vector<128x16xf32>
    %c0_17 = arith.constant 0 : index
    %c0_18 = arith.constant 0 : index
    %22 = vector.load %arg8[%c0_17, %c0_18] : memref<16x16xf32, #tpu.memory_space<vmem>>, vector<16x16xf32>
    %cst_19 = arith.constant dense<0.000000e+00> : vector<128x16xf32>
    %23 = tpu.matmul %21, %22, %cst_19 {dimension_numbers = #tpu.dot_dimension_numbers<[1], [0], [0], [1], [0, 0, 1, 1], [], []>} : vector<128x16xf32>, vector<16x16xf32>, vector<128x16xf32> -> vector<128x16xf32>
    %24 = arith.addf %18, %20 : vector<128x16xf32>
    %25 = arith.subf %23, %18 : vector<128x16xf32>
    %26 = arith.addf %25, %20 : vector<128x16xf32>
    %27 = arith.mulf %24, %24 : vector<128x16xf32>
    %28 = arith.mulf %26, %26 : vector<128x16xf32>
    %29 = arith.addf %27, %28 : vector<128x16xf32>
    %30 = math.sqrt %29 : vector<128x16xf32>
    %c0_20 = arith.constant 0 : index
    %c0_21 = arith.constant 0 : index
    %31 = vector.load %arg10[%c0_20, %c0_21] : memref<8x16xf32, #tpu.memory_space<vmem>>, vector<8x16xf32>
    %32 = vector.shape_cast %30 : vector<128x16xf32> to vector<16x8x16xf32>
    %cst_22 = arith.constant dense<0.000000e+00> : vector<8x16xf32>
    %33 = vector.multi_reduction <add>, %32, %cst_22 [0] : vector<16x8x16xf32> to vector<8x16xf32>
    %34 = arith.addf %31, %33 : vector<8x16xf32>
    %c0_23 = arith.constant 0 : index
    %c0_24 = arith.constant 0 : index
    %35 = vector.load %arg10[%c0_23, %c0_24] : memref<8x16xf32, #tpu.memory_space<vmem>>, vector<8x16xf32>
    tpu.vector_store %arg10[%c0_23, %c0_24], %34 {strides = array<i32>} : memref<8x16xf32, #tpu.memory_space<vmem>>, vector<8x16xf32>,
    %c0_i32_25 = arith.constant 0 : i32
    %36 = arith.cmpi eq, %arg1, %c0_i32_25 : i32
    %37 = arith.extui %36 : i1 to i32
    %c0_i32_26 = arith.constant 0 : i32
    %38 = arith.cmpi ne, %37, %c0_i32_26 : i32
    scf.if %38 {
      %c0_27 = arith.constant 0 : index
      %c0_28 = arith.constant 0 : index
      %39 = vector.load %arg10[%c0_27, %c0_28] : memref<8x16xf32, #tpu.memory_space<vmem>>, vector<8x16xf32>
      %40 = vector.shape_cast %39 : vector<8x16xf32> to vector<1x8x16xf32>
      %cst_29 = arith.constant dense<0.000000e+00> : vector<1xf32>
      %41 = vector.multi_reduction <add>, %40, %cst_29 [1, 2] : vector<1x8x16xf32> to vector<1xf32>
      %42 = vector.shape_cast %41 : vector<1xf32> to vector<1x1x1xf32>
      %43 = vector.extract %42[0, 0, 0] : f32 from vector<1x1x1xf32>
      %c0_30 = arith.constant 0 : index
      %c0_31 = arith.constant 0 : index
      %44 = memref.load %arg9[%c0_30, %c0_31] : memref<1x1xf32, #tpu.memory_space<smem>>
      memref.store %43, %arg9[%c0_30, %c0_31] : memref<1x1xf32, #tpu.memory_space<smem>>
    } else {
    }
    return
  }
  func.func @transform_0(%arg0: i32, %arg1: i32) -> (i32, i32, i32) {
    %c1_i32 = arith.constant 1 : i32
    %0 = arith.muli %arg0, %c1_i32 : i32
    %1 = arith.addi %0, %arg1 : i32
    %c0_i32 = arith.constant 0 : i32
    %c0_i32_0 = arith.constant 0 : i32
    %c0_i32_1 = arith.constant 0 : i32
    return %1, %c0_i32, %c0_i32_0 : i32, i32, i32
  }
  func.func @transform_1(%arg0: i32, %arg1: i32) -> (i32, i32, i32) {
    %c1_i32 = arith.constant 1 : i32
    %0 = arith.muli %arg0, %c1_i32 : i32
    %1 = arith.addi %0, %arg1 : i32
    %c0_i32 = arith.constant 0 : i32
    %c0_i32_0 = arith.constant 0 : i32
    %c0_i32_1 = arith.constant 0 : i32
    return %1, %c0_i32, %c0_i32_0 : i32, i32, i32
  }
  func.func @transform_2(%arg0: i32, %arg1: i32) -> (i32, i32) {
    %c0_i32 = arith.constant 0 : i32
    %c0_i32_0 = arith.constant 0 : i32
    %c0_i32_1 = arith.constant 0 : i32
    return %c0_i32, %c0_i32_0 : i32, i32
  }
  func.func @transform_3(%arg0: i32, %arg1: i32) -> (i32, i32) {
    %c0_i32 = arith.constant 0 : i32
    %c0_i32_0 = arith.constant 0 : i32
    %c0_i32_1 = arith.constant 0 : i32
    return %c0_i32, %c0_i32_0 : i32, i32
  }
  func.func @transform_4(%arg0: i32, %arg1: i32) -> (i32, i32) {
    %c0_i32 = arith.constant 0 : i32
    %c0_i32_0 = arith.constant 0 : i32
    %c0_i32_1 = arith.constant 0 : i32
    return %c0_i32, %c0_i32_0 : i32, i32
  }
  func.func @transform_5(%arg0: i32, %arg1: i32) -> (i32, i32) {
    %c0_i32 = arith.constant 0 : i32
    %c0_i32_0 = arith.constant 0 : i32
    %c0_i32_1 = arith.constant 0 : i32
    return %c0_i32, %c0_i32_0 : i32, i32
  }
  func.func @transform_6(%arg0: i32, %arg1: i32) -> (i32, i32) {
    %c0_i32 = arith.constant 0 : i32
    %c0_i32_0 = arith.constant 0 : i32
    %c0_i32_1 = arith.constant 0 : i32
    return %c0_i32, %c0_i32_0 : i32, i32
  }
  func.func @transform_7(%arg0: i32, %arg1: i32) -> (i32, i32) {
    %c0_i32 = arith.constant 0 : i32
    %c0_i32_0 = arith.constant 0 : i32
    return %arg0, %c0_i32 : i32, i32
  }
}

</mosaic_0001>

<llo_original>
// kernel: tpu_custom_call.1
$region0: #{tpu_custom_call.1}
  #allocation0 [shape = 'u32[]', space=smem, size = 0x4, offset = 0x4, fixed_abs, tag = 'smem constant byte address 0x4 - core index']
  #allocation1 [shape = 'u32[72,128]{1,0:T(1,128)}', space=vmem, size = 0x9000, scoped, tag = 'internal scratch']
  #allocation2 [shape = 'f32[8,16]{1,0:T(8,128)}', space=vmem, size = 0x1000, scoped, tag = 'scratch operand']
  %s0 = inlined_call_operand.hbm [shape: f32[1,16,128], index: 0, kind: input, shape index: {}]
  %s1 = inlined_call_operand.hbm [shape: f32[1,16,128], index: 1, kind: input, shape index: {}]
  %s2 = inlined_call_operand.hbm [shape: f32[128,128], index: 2, kind: input, shape index: {}]
  %s3 = inlined_call_operand.hbm [shape: f32[128,128], index: 3, kind: input, shape index: {}]
  %s4 = inlined_call_operand.hbm [shape: f32[16,16], index: 4, kind: input, shape index: {}]
  %s5 = inlined_call_operand.hbm [shape: f32[16,16], index: 5, kind: input, shape index: {}]
  %s6 = inlined_call_operand.hbm [shape: f32[16,16], index: 6, kind: input, shape index: {}]
  %s7 = inlined_call_operand.hbm [shape: f32[1,1], index: 7, kind: output, shape index: {}]
  %s8 = sld [smem:[#allocation0]]
  $region74: #{tpu_custom_call.1} parent=0
    _
  %s10 = ssub.s32 1, %s8
  %s11 = scalar_select 0, %s10, %s8
  $region1: #{tpu_custom_call.1} parent=0
    #allocation3 [shape = 'u8[8192]{0}', space=vmem, size = 0x2000, scoped, tag = 'input window, operand 0, single buffered']
    #allocation4 [shape = 's32[1]{0}', space=sflag, size = 0x4, scoped, tag = 'scoped memory for tpu_custom_call.1']
    #allocation5 [shape = 's32[1]{0}', space=sflag, size = 0x4, scoped, tag = 'scoped memory for tpu_custom_call.1']
    #allocation6 [shape = 'u8[8192]{0}', space=vmem, size = 0x2000, scoped, tag = 'input window, operand 1, single buffered']
    #allocation7 [shape = 's32[1]{0}', space=sflag, size = 0x4, scoped, tag = 'scoped memory for tpu_custom_call.1']
    #allocation8 [shape = 'u8[65536]{0}', space=vmem, size = 0x10000, scoped, tag = 'input window, operand 2, single buffered']
    #allocation9 [shape = 'u8[65536]{0}', space=vmem, size = 0x10000, scoped, tag = 'input window, operand 3, single buffered']
    #allocation10 [shape = 's32[1]{0}', space=sflag, size = 0x4, scoped, tag = 'scoped memory for tpu_custom_call.1']
    #allocation11 [shape = 'u8[8192]{0}', space=vmem, size = 0x2000, scoped, tag = 'input window, operand 4, single buffered']
    #allocation12 [shape = 'u8[8192]{0}', space=vmem, size = 0x2000, scoped, tag = 'input window, operand 5, single buffered']
    #allocation13 [shape = 's32[1]{0}', space=sflag, size = 0x4, scoped, tag = 'scoped memory for tpu_custom_call.1']
    #allocation14 [shape = 'u8[8192]{0}', space=vmem, size = 0x2000, scoped, tag = 'input window, operand 6, single buffered']
    #allocation15 [shape = 'u8[512]{0}', space=smem, size = 0x200, scoped, tag = 'output window, operand 0, single buffered']
    %12 = vsyncpa [#allocation4], 0
    %13 = vsyncpa [#allocation7], 0
    %14 = vsyncpa [#allocation10], 0
    %15 = vsyncpa [#allocation13], 0
    %16 = vsyncpa [#allocation5], 0
    // Predicated region
    $region2: #{tpu_custom_call.1} parent=1 // pred_check
      _
    $region3: #{tpu_custom_call.1} parent=1 // pred_check_branch
      %18 = sbr.rel (0) target = $region5
    $region4: #{tpu_custom_call.1} parent=1 // pred_region
      %s19 = sadd.s32 0, 0
      %21 = vsyncadd [#allocation4], 0
      %s22 = smul.addr %s19, 2
      %s23 = smul.addr %s22, 8
      %s24 = scalar_lea.hbm %s0, %s23
      %s25 = sshll.u32 %s24, 4
      %s26 = int_to_ptr.hbm [resolvable:$true] %s25
      %s27 = sshll.u32 [#allocation3], 4
      %s28 = int_to_ptr.vmem [resolvable:$true] %s27
      %33 = dma.hbm_to_vmem [thread:$0]  %s26, 256, %s28, [#allocation4], 128, 128, 8
    $region5: #{tpu_custom_call.1} parent=1 // pred_fallthru
      _
    // Predicated region
    $region6: #{tpu_custom_call.1} parent=1 // pred_check
      _
    $region7: #{tpu_custom_call.1} parent=1 // pred_check_branch
      %35 = sbr.rel (0) target = $region9
    $region8: #{tpu_custom_call.1} parent=1 // pred_region
      %s36 = sadd.s32 0, 0
      %38 = vsyncadd [#allocation7], 0
      %s39 = smul.addr %s36, 2
      %s40 = smul.addr %s39, 8
      %s41 = scalar_lea.hbm %s1, %s40
      %s42 = sshll.u32 %s41, 4
      %s43 = int_to_ptr.hbm [resolvable:$true] %s42
      %s44 = sshll.u32 [#allocation6], 4
      %s45 = int_to_ptr.vmem [resolvable:$true] %s44
      %50 = dma.hbm_to_vmem [thread:$0]  %s43, 256, %s45, [#allocation7], 128, 128, 8
    $region9: #{tpu_custom_call.1} parent=1 // pred_fallthru
      _
    // Predicated region
    $region10: #{tpu_custom_call.1} parent=1 // pred_check
      _
    $region11: #{tpu_custom_call.1} parent=1 // pred_check_branch
      %52 = sbr.rel (0) target = $region13
    $region12: #{tpu_custom_call.1} parent=1 // pred_region
      %54 = vsyncadd [#allocation7], 0
      %s55 = sshll.u32 %s2, 4
      %s56 = int_to_ptr.hbm [resolvable:$true] %s55
      %s57 = sshll.u32 [#allocation8], 4
      %s58 = int_to_ptr.vmem [resolvable:$true] %s57
      %63 = dma.hbm_to_vmem [thread:$0]  %s56, 2048, %s58, [#allocation7], 128, 128, 8
    $region13: #{tpu_custom_call.1} parent=1 // pred_fallthru
      _
    // Predicated region
    $region14: #{tpu_custom_call.1} parent=1 // pred_check
      _
    $region15: #{tpu_custom_call.1} parent=1 // pred_check_branch
      %65 = sbr.rel (0) target = $region17
    $region16: #{tpu_custom_call.1} parent=1 // pred_region
      %67 = vsyncadd [#allocation10], 0
      %s68 = sshll.u32 %s3, 4
      %s69 = int_to_ptr.hbm [resolvable:$true] %s68
      %s70 = sshll.u32 [#allocation9], 4
      %s71 = int_to_ptr.vmem [resolvable:$true] %s70
      %76 = dma.hbm_to_vmem [thread:$0]  %s69, 2048, %s71, [#allocation10], 128, 128, 8
    $region17: #{tpu_custom_call.1} parent=1 // pred_fallthru
      _
    // Predicated region
    $region18: #{tpu_custom_call.1} parent=1 // pred_check
      _
    $region19: #{tpu_custom_call.1} parent=1 // pred_check_branch
      %78 = sbr.rel (0) target = $region21
    $region20: #{tpu_custom_call.1} parent=1 // pred_region
      %80 = vsyncadd [#allocation10], 0
      %s81 = sshll.u32 %s4, 4
      %s82 = int_to_ptr.hbm [resolvable:$true] %s81
      %s83 = sshll.u32 [#allocation11], 4
      %s84 = int_to_ptr.vmem [resolvable:$true] %s83
      %89 = dma.hbm_to_vmem [thread:$0]  %s82, 256, %s84, [#allocation10], 128, 128, 8
    $region21: #{tpu_custom_call.1} parent=1 // pred_fallthru
      _
    // Predicated region
    $region22: #{tpu_custom_call.1} parent=1 // pred_check
      _
    $region23: #{tpu_custom_call.1} parent=1 // pred_check_branch
      %91 = sbr.rel (0) target = $region25
    $region24: #{tpu_custom_call.1} parent=1 // pred_region
      %93 = vsyncadd [#allocation13], 0
      %s94 = sshll.u32 %s5, 4
      %s95 = int_to_ptr.hbm [resolvable:$true] %s94
      %s96 = sshll.u32 [#allocation12], 4
      %s97 = int_to_ptr.vmem [resolvable:$true] %s96
      %102 = dma.hbm_to_vmem [thread:$0]  %s95, 256, %s97, [#allocation13], 128, 128, 8
    $region25: #{tpu_custom_call.1} parent=1 // pred_fallthru
      _
    // Predicated region
    $region26: #{tpu_custom_call.1} parent=1 // pred_check
      _
    $region27: #{tpu_custom_call.1} parent=1 // pred_check_branch
      %104 = sbr.rel (0) target = $region29
    $region28: #{tpu_custom_call.1} parent=1 // pred_region
      %106 = vsyncadd [#allocation13], 0
      %s107 = sshll.u32 %s6, 4
      %s108 = int_to_ptr.hbm [resolvable:$true] %s107
      %s109 = sshll.u32 [#allocation14], 4
      %s110 = int_to_ptr.vmem [resolvable:$true] %s109
      %115 = dma.hbm_to_vmem [thread:$0]  %s108, 256, %s110, [#allocation13], 128, 128, 8
    $region29: #{tpu_custom_call.1} parent=1 // pred_fallthru
      _
    // Predicated region
    $region30: #{tpu_custom_call.1} parent=1 // pred_check
      _
    $region31: #{tpu_custom_call.1} parent=1 // pred_check_branch
      %117 = sbr.rel (0) target = $region33
    $region32: #{tpu_custom_call.1} parent=1 // pred_region
      %119 = dma.done [#allocation4], 256
    $region33: #{tpu_custom_call.1} parent=1 // pred_fallthru
      _
    // Predicated region
    $region34: #{tpu_custom_call.1} parent=1 // pred_check
      _
    $region35: #{tpu_custom_call.1} parent=1 // pred_check_branch
      %121 = sbr.rel (0) target = $region37
    $region36: #{tpu_custom_call.1} parent=1 // pred_region
      %123 = dma.done [#allocation7], 256
    $region37: #{tpu_custom_call.1} parent=1 // pred_fallthru
      _
    // Predicated region
    $region38: #{tpu_custom_call.1} parent=1 // pred_check
      _
    $region39: #{tpu_custom_call.1} parent=1 // pred_check_branch
      %125 = sbr.rel (0) target = $region41
    $region40: #{tpu_custom_call.1} parent=1 // pred_region
      %127 = dma.done [#allocation7], 2048
    $region41: #{tpu_custom_call.1} parent=1 // pred_fallthru
      _
    // Predicated region
    $region42: #{tpu_custom_call.1} parent=1 // pred_check
      _
    $region43: #{tpu_custom_call.1} parent=1 // pred_check_branch
      %129 = sbr.rel (0) target = $region45
    $region44: #{tpu_custom_call.1} parent=1 // pred_region
      %131 = dma.done [#allocation10], 2048
    $region45: #{tpu_custom_call.1} parent=1 // pred_fallthru
      _
    // Predicated region
    $region46: #{tpu_custom_call.1} parent=1 // pred_check
      _
    $region47: #{tpu_custom_call.1} parent=1 // pred_check_branch
      %133 = sbr.rel (0) target = $region49
    $region48: #{tpu_custom_call.1} parent=1 // pred_region
      %135 = dma.done [#allocation10], 256
    $region49: #{tpu_custom_call.1} parent=1 // pred_fallthru
      _
    // Predicated region
    $region50: #{tpu_custom_call.1} parent=1 // pred_check
      _
    $region51: #{tpu_custom_call.1} parent=1 // pred_check_branch
      %137 = sbr.rel (0) target = $region53
    $region52: #{tpu_custom_call.1} parent=1 // pred_region
      %139 = dma.done [#allocation13], 256
    $region53: #{tpu_custom_call.1} parent=1 // pred_fallthru
      _
    // Predicated region
    $region54: #{tpu_custom_call.1} parent=1 // pred_check
      _
    $region55: #{tpu_custom_call.1} parent=1 // pred_check_branch
      %141 = sbr.rel (0) target = $region57
    $region56: #{tpu_custom_call.1} parent=1 // pred_region
      %143 = dma.done [#allocation13], 256
    $region57: #{tpu_custom_call.1} parent=1 // pred_fallthru
      _
    %s144 = sadd.s32 0, 0
    %s145 = sadd.s32 0, 0
    %p146 = scmp.eq.s32.totalorder 0, 0
    // Predicated region
    $region58: #{tpu_custom_call.1} parent=1 // pred_check
      %p147 = pneg %p146
    $region59: #{tpu_custom_call.1} parent=1 // pred_check_branch
      %149 = sbr.rel (%p147) target = $region61
    $region60: #{tpu_custom_call.1} parent=1 // pred_region
      %vm150 = vcmask 130048
      %151 = vst.msk [vmem:[#allocation2] sm:$0xff] %vm150, 0.0
    $region61: #{tpu_custom_call.1} parent=1 // pred_fallthru
      _
    %v152 = vld [vmem:[#allocation3] sm:$0xff]
    %v153 = vld [vmem:[#allocation3 + $0x8] sm:$0xff]
    %v154 = vld [vmem:[#allocation6] sm:$0xff]
    %v155 = vld [vmem:[#allocation6 + $0x8] sm:$0xff]
    %v156 = vsub.f32 %v152, %v154
    %v157 = vsub.f32 %v153, %v155
    %v158 = vld [vmem:[#allocation8] sm:$0xff]
    %v159 = vld [vmem:[#allocation8 + $0x8] sm:$0xff]
    %v160 = vld [vmem:[#allocation8 + $0x10] sm:$0xff]
    %v161 = vld [vmem:[#allocation8 + $0x18] sm:$0xff]
    %v162 = vld [vmem:[#allocation8 + $0x20] sm:$0xff]
    %v163 = vld [vmem:[#allocation8 + $0x28] sm:$0xff]
    %v164 = vld [vmem:[#allocation8 + $0x30] sm:$0xff]
    %v165 = vld [vmem:[#allocation8 + $0x38] sm:$0xff]
    %v166 = vld [vmem:[#allocation8 + $0x40] sm:$0xff]
    %v167 = vld [vmem:[#allocation8 + $0x48] sm:$0xff]
    %v168 = vld [vmem:[#allocation8 + $0x50] sm:$0xff]
    %v169 = vld [vmem:[#allocation8 + $0x58] sm:$0xff]
    %v170 = vld [vmem:[#allocation8 + $0x60] sm:$0xff]
    %v171 = vld [vmem:[#allocation8 + $0x68] sm:$0xff]
    %v172 = vld [vmem:[#allocation8 + $0x70] sm:$0xff]
    %v173 = vld [vmem:[#allocation8 + $0x78] sm:$0xff]
    %174 = vmatpush.msra.mxu0 %v173
    %175 = vmatpush.msra.mxu0 %v172
    %176 = vmatpush.msra.mxu0 %v171
    %177 = vmatpush.msra.mxu0 %v170
    %178 = vmatpush.msra.mxu0 %v169
    %179 = vmatpush.msra.mxu0 %v168
    %180 = vmatpush.msra.mxu0 %v167
    %181 = vmatpush.msra.mxu0 %v166
    %182 = vmatpush.msra.mxu0 %v165
    %183 = vmatpush.msra.mxu0 %v164
    %184 = vmatpush.msra.mxu0 %v163
    %185 = vmatpush.msra.mxu0 %v162
    %186 = vmatpush.msra.mxu0 %v161
    %187 = vmatpush.msra.mxu0 %v160
    %188 = vmatpush.msra.mxu0 %v159
    %189 = vmatpush.msra.mxu0 %v158
    %190 = vmatmul.f32.gmra.mxu0 %v156
    %v191 = vpop.f32.mrf.mxu0
    %v192 = vadd.f32 0.0, %v191
    %193 = vmatmul.f32.gmra.mxu0 %v157
    %v194 = vpop.f32.mrf.mxu0
    %v195 = vadd.f32 0.0, %v194
    %196 = vdwg.mxu0
    %v197 = vld [vmem:[#allocation9] sm:$0xff]
    %v198 = vld [vmem:[#allocation9 + $0x8] sm:$0xff]
    %v199 = vld [vmem:[#allocation9 + $0x10] sm:$0xff]
    %v200 = vld [vmem:[#allocation9 + $0x18] sm:$0xff]
    %v201 = vld [vmem:[#allocation9 + $0x20] sm:$0xff]
    %v202 = vld [vmem:[#allocation9 + $0x28] sm:$0xff]
    %v203 = vld [vmem:[#allocation9 + $0x30] sm:$0xff]
    %v204 = vld [vmem:[#allocation9 + $0x38] sm:$0xff]
    %v205 = vld [vmem:[#allocation9 + $0x40] sm:$0xff]
    %v206 = vld [vmem:[#allocation9 + $0x48] sm:$0xff]
    %v207 = vld [vmem:[#allocation9 + $0x50] sm:$0xff]
    %v208 = vld [vmem:[#allocation9 + $0x58] sm:$0xff]
    %v209 = vld [vmem:[#allocation9 + $0x60] sm:$0xff]
    %v210 = vld [vmem:[#allocation9 + $0x68] sm:$0xff]
    %v211 = vld [vmem:[#allocation9 + $0x70] sm:$0xff]
    %v212 = vld [vmem:[#allocation9 + $0x78] sm:$0xff]
    %213 = vmatpush.msra.mxu0 %v212
    %214 = vmatpush.msra.mxu0 %v211
    %215 = vmatpush.msra.mxu0 %v210
    %216 = vmatpush.msra.mxu0 %v209
    %217 = vmatpush.msra.mxu0 %v208
    %218 = vmatpush.msra.mxu0 %v207
    %219 = vmatpush.msra.mxu0 %v206
    %220 = vmatpush.msra.mxu0 %v205
    %221 = vmatpush.msra.mxu0 %v204
    %222 = vmatpush.msra.mxu0 %v203
    %223 = vmatpush.msra.mxu0 %v202
    %224 = vmatpush.msra.mxu0 %v201
    %225 = vmatpush.msra.mxu0 %v200
    %226 = vmatpush.msra.mxu0 %v199
    %227 = vmatpush.msra.mxu0 %v198
    %228 = vmatpush.msra.mxu0 %v197
    %229 = vmatmul.f32.gmra.mxu0 %v156
    %v230 = vpop.f32.mrf.mxu0
    %v231 = vadd.f32 0.0, %v230
    %232 = vmatmul.f32.gmra.mxu0 %v157
    %v233 = vpop.f32.mrf.mxu0
    %v234 = vadd.f32 0.0, %v233
    %235 = vdwg.mxu0
    %236 = vxpose.xlu0.b32.start [1/16] %v192, 128
    %237 = vxpose.xlu0.b32.cont [2/16] %v195, 128
    %238 = vxpose.xlu0.b32.cont [3/16] 0.0, 128
    %239 = vxpose.xlu0.b32.cont [4/16] 0.0, 128
    %240 = vxpose.xlu0.b32.cont [5/16] 0.0, 128
    %241 = vxpose.xlu0.b32.cont [6/16] 0.0, 128
    %242 = vxpose.xlu0.b32.cont [7/16] 0.0, 128
    %243 = vxpose.xlu0.b32.cont [8/16] 0.0, 128
    %244 = vxpose.xlu0.b32.cont [9/16] 0.0, 128
    %245 = vxpose.xlu0.b32.cont [10/16] 0.0, 128
    %246 = vxpose.xlu0.b32.cont [11/16] 0.0, 128
    %247 = vxpose.xlu0.b32.cont [12/16] 0.0, 128
    %248 = vxpose.xlu0.b32.cont [13/16] 0.0, 128
    %249 = vxpose.xlu0.b32.cont [14/16] 0.0, 128
    %250 = vxpose.xlu0.b32.cont [15/16] 0.0, 128
    %251 = vxpose.xlu0.b32.end [16/16] 0.0, 128
    %v252 = vpop.trf.xlu0
    %v253 = vpop.trf.xlu0
    %v254 = vpop.trf.xlu0
    %v255 = vpop.trf.xlu0
    %v256 = vpop.trf.xlu0
    %v257 = vpop.trf.xlu0
    %v258 = vpop.trf.xlu0
    %v259 = vpop.trf.xlu0
    %v260 = vpop.trf.xlu0
    %v261 = vpop.trf.xlu0
    %v262 = vpop.trf.xlu0
    %v263 = vpop.trf.xlu0
    %v264 = vpop.trf.xlu0
    %v265 = vpop.trf.xlu0
    %v266 = vpop.trf.xlu0
    %v267 = vpop.trf.xlu0
    %268 = vxpose.xlu0.b32.start [1/16] %v231, 128
    %269 = vxpose.xlu0.b32.cont [2/16] %v234, 128
    %270 = vxpose.xlu0.b32.cont [3/16] 0.0, 128
    %271 = vxpose.xlu0.b32.cont [4/16] 0.0, 128
    %272 = vxpose.xlu0.b32.cont [5/16] 0.0, 128
    %273 = vxpose.xlu0.b32.cont [6/16] 0.0, 128
    %274 = vxpose.xlu0.b32.cont [7/16] 0.0, 128
    %275 = vxpose.xlu0.b32.cont [8/16] 0.0, 128
    %276 = vxpose.xlu0.b32.cont [9/16] 0.0, 128
    %277 = vxpose.xlu0.b32.cont [10/16] 0.0, 128
    %278 = vxpose.xlu0.b32.cont [11/16] 0.0, 128
    %279 = vxpose.xlu0.b32.cont [12/16] 0.0, 128
    %280 = vxpose.xlu0.b32.cont [13/16] 0.0, 128
    %281 = vxpose.xlu0.b32.cont [14/16] 0.0, 128
    %282 = vxpose.xlu0.b32.cont [15/16] 0.0, 128
    %283 = vxpose.xlu0.b32.end [16/16] 0.0, 128
    %v284 = vpop.trf.xlu0
    %v285 = vpop.trf.xlu0
    %v286 = vpop.trf.xlu0
    %v287 = vpop.trf.xlu0
    %v288 = vpop.trf.xlu0
    %v289 = vpop.trf.xlu0
    %v290 = vpop.trf.xlu0
    %v291 = vpop.trf.xlu0
    %v292 = vpop.trf.xlu0
    %v293 = vpop.trf.xlu0
    %v294 = vpop.trf.xlu0
    %v295 = vpop.trf.xlu0
    %v296 = vpop.trf.xlu0
    %v297 = vpop.trf.xlu0
    %v298 = vpop.trf.xlu0
    %v299 = vpop.trf.xlu0
    %v300 = vld [vmem:[#allocation11] sm:$0xff]
    %v301 = vld [vmem:[#allocation11 + $0x8] sm:$0xff]
    %vm302 = vcmask 130048
    %v304 = vsel %vm302, %v252, 0
    %v307 = vsel %vm302, %v253, 0
    %v310 = vsel %vm302, %v254, 0
    %v313 = vsel %vm302, %v255, 0
    %v316 = vsel %vm302, %v256, 0
    %v319 = vsel %vm302, %v257, 0
    %v322 = vsel %vm302, %v258, 0
    %v325 = vsel %vm302, %v259, 0
    %v328 = vsel %vm302, %v260, 0
    %v331 = vsel %vm302, %v261, 0
    %v334 = vsel %vm302, %v262, 0
    %v337 = vsel %vm302, %v263, 0
    %v340 = vsel %vm302, %v264, 0
    %v343 = vsel %vm302, %v265, 0
    %v346 = vsel %vm302, %v266, 0
    %v349 = vsel %vm302, %v267, 0
    %351 = vmatpush.msra.mxu0 0.0
    %352 = vmatpush.msra.mxu0 0.0
    %353 = vmatpush.msra.mxu0 0.0
    %354 = vmatpush.msra.mxu0 0.0
    %355 = vmatpush.msra.mxu0 0.0
    %356 = vmatpush.msra.mxu0 0.0
    %357 = vmatpush.msra.mxu0 0.0
    %358 = vmatpush.msra.mxu0 0.0
    %359 = vmatpush.msra.mxu0 0.0
    %360 = vmatpush.msra.mxu0 0.0
    %361 = vmatpush.msra.mxu0 0.0
    %362 = vmatpush.msra.mxu0 0.0
    %363 = vmatpush.msra.mxu0 0.0
    %364 = vmatpush.msra.mxu0 0.0
    %365 = vmatpush.msra.mxu0 %v301
    %366 = vmatpush.msra.mxu0 %v300
    %367 = vmatmul.f32.gmra.mxu0 %v304
    %v368 = vpop.f32.mrf.mxu0
    %v369 = vadd.f32 0.0, %v368
    %370 = vmatmul.f32.gmra.mxu0 %v307
    %v371 = vpop.f32.mrf.mxu0
    %v372 = vadd.f32 0.0, %v371
    %373 = vmatmul.f32.gmra.mxu0 %v310
    %v374 = vpop.f32.mrf.mxu0
    %v375 = vadd.f32 0.0, %v374
    %376 = vmatmul.f32.gmra.mxu0 %v313
    %v377 = vpop.f32.mrf.mxu0
    %v378 = vadd.f32 0.0, %v377
    %379 = vmatmul.f32.gmra.mxu0 %v316
    %v380 = vpop.f32.mrf.mxu0
    %v381 = vadd.f32 0.0, %v380
    %382 = vmatmul.f32.gmra.mxu0 %v319
    %v383 = vpop.f32.mrf.mxu0
    %v384 = vadd.f32 0.0, %v383
    %385 = vmatmul.f32.gmra.mxu0 %v322
    %v386 = vpop.f32.mrf.mxu0
    %v387 = vadd.f32 0.0, %v386
    %388 = vmatmul.f32.gmra.mxu0 %v325
    %v389 = vpop.f32.mrf.mxu0
    %v390 = vadd.f32 0.0, %v389
    %391 = vmatmul.f32.gmra.mxu0 %v328
    %v392 = vpop.f32.mrf.mxu0
    %v393 = vadd.f32 0.0, %v392
    %394 = vmatmul.f32.gmra.mxu0 %v331
    %v395 = vpop.f32.mrf.mxu0
    %v396 = vadd.f32 0.0, %v395
    %397 = vmatmul.f32.gmra.mxu0 %v334
    %v398 = vpop.f32.mrf.mxu0
    %v399 = vadd.f32 0.0, %v398
    %400 = vmatmul.f32.gmra.mxu0 %v337
    %v401 = vpop.f32.mrf.mxu0
    %v402 = vadd.f32 0.0, %v401
    %403 = vmatmul.f32.gmra.mxu0 %v340
    %v404 = vpop.f32.mrf.mxu0
    %v405 = vadd.f32 0.0, %v404
    %406 = vmatmul.f32.gmra.mxu0 %v343
    %v407 = vpop.f32.mrf.mxu0
    %v408 = vadd.f32 0.0, %v407
    %409 = vmatmul.f32.gmra.mxu0 %v346
    %v410 = vpop.f32.mrf.mxu0
    %v411 = vadd.f32 0.0, %v410
    %412 = vmatmul.f32.gmra.mxu0 %v349
    %v413 = vpop.f32.mrf.mxu0
    %v414 = vadd.f32 0.0, %v413
    %415 = vdwg.mxu0
    %v416 = vld [vmem:[#allocation12] sm:$0xff]
    %v417 = vld [vmem:[#allocation12 + $0x8] sm:$0xff]
    %v419 = vsel %vm302, %v284, 0
    %v422 = vsel %vm302, %v285, 0
    %v425 = vsel %vm302, %v286, 0
    %v428 = vsel %vm302, %v287, 0
    %v431 = vsel %vm302, %v288, 0
    %v434 = vsel %vm302, %v289, 0
    %v437 = vsel %vm302, %v290, 0
    %v440 = vsel %vm302, %v291, 0
    %v443 = vsel %vm302, %v292, 0
    %v446 = vsel %vm302, %v293, 0
    %v449 = vsel %vm302, %v294, 0
    %v452 = vsel %vm302, %v295, 0
    %v455 = vsel %vm302, %v296, 0
    %v458 = vsel %vm302, %v297, 0
    %v461 = vsel %vm302, %v298, 0
    %v464 = vsel %vm302, %v299, 0
    %466 = vmatpush.msra.mxu0 0.0
    %467 = vmatpush.msra.mxu0 0.0
    %468 = vmatpush.msra.mxu0 0.0
    %469 = vmatpush.msra.mxu0 0.0
    %470 = vmatpush.msra.mxu0 0.0
    %471 = vmatpush.msra.mxu0 0.0
    %472 = vmatpush.msra.mxu0 0.0
    %473 = vmatpush.msra.mxu0 0.0
    %474 = vmatpush.msra.mxu0 0.0
    %475 = vmatpush.msra.mxu0 0.0
    %476 = vmatpush.msra.mxu0 0.0
    %477 = vmatpush.msra.mxu0 0.0
    %478 = vmatpush.msra.mxu0 0.0
    %479 = vmatpush.msra.mxu0 0.0
    %480 = vmatpush.msra.mxu0 %v417
    %481 = vmatpush.msra.mxu0 %v416
    %482 = vmatmul.f32.gmra.mxu0 %v419
    %v483 = vpop.f32.mrf.mxu0
    %v484 = vadd.f32 0.0, %v483
    %485 = vmatmul.f32.gmra.mxu0 %v422
    %v486 = vpop.f32.mrf.mxu0
    %v487 = vadd.f32 0.0, %v486
    %488 = vmatmul.f32.gmra.mxu0 %v425
    %v489 = vpop.f32.mrf.mxu0
    %v490 = vadd.f32 0.0, %v489
    %491 = vmatmul.f32.gmra.mxu0 %v428
    %v492 = vpop.f32.mrf.mxu0
    %v493 = vadd.f32 0.0, %v492
    %494 = vmatmul.f32.gmra.mxu0 %v431
    %v495 = vpop.f32.mrf.mxu0
    %v496 = vadd.f32 0.0, %v495
    %497 = vmatmul.f32.gmra.mxu0 %v434
    %v498 = vpop.f32.mrf.mxu0
    %v499 = vadd.f32 0.0, %v498
    %500 = vmatmul.f32.gmra.mxu0 %v437
    %v501 = vpop.f32.mrf.mxu0
    %v502 = vadd.f32 0.0, %v501
    %503 = vmatmul.f32.gmra.mxu0 %v440
    %v504 = vpop.f32.mrf.mxu0
    %v505 = vadd.f32 0.0, %v504
    %506 = vmatmul.f32.gmra.mxu0 %v443
    %v507 = vpop.f32.mrf.mxu0
    %v508 = vadd.f32 0.0, %v507
    %509 = vmatmul.f32.gmra.mxu0 %v446
    %v510 = vpop.f32.mrf.mxu0
    %v511 = vadd.f32 0.0, %v510
    %512 = vmatmul.f32.gmra.mxu0 %v449
    %v513 = vpop.f32.mrf.mxu0
    %v514 = vadd.f32 0.0, %v513
    %515 = vmatmul.f32.gmra.mxu0 %v452
    %v516 = vpop.f32.mrf.mxu0
    %v517 = vadd.f32 0.0, %v516
    %518 = vmatmul.f32.gmra.mxu0 %v455
    %v519 = vpop.f32.mrf.mxu0
    %v520 = vadd.f32 0.0, %v519
    %521 = vmatmul.f32.gmra.mxu0 %v458
    %v522 = vpop.f32.mrf.mxu0
    %v523 = vadd.f32 0.0, %v522
    %524 = vmatmul.f32.gmra.mxu0 %v461
    %v525 = vpop.f32.mrf.mxu0
    %v526 = vadd.f32 0.0, %v525
    %527 = vmatmul.f32.gmra.mxu0 %v464
    %v528 = vpop.f32.mrf.mxu0
    %v529 = vadd.f32 0.0, %v528
    %530 = vdwg.mxu0
    %v531 = vadd.f32 %v252, %v284
    %v532 = vadd.f32 %v253, %v285
    %v533 = vadd.f32 %v254, %v286
    %v534 = vadd.f32 %v255, %v287
    %v535 = vadd.f32 %v256, %v288
    %v536 = vadd.f32 %v257, %v289
    %v537 = vadd.f32 %v258, %v290
    %v538 = vadd.f32 %v259, %v291
    %v539 = vadd.f32 %v260, %v292
    %v540 = vadd.f32 %v261, %v293
    %v541 = vadd.f32 %v262, %v294
    %v542 = vadd.f32 %v263, %v295
    %v543 = vadd.f32 %v264, %v296
    %v544 = vadd.f32 %v265, %v297
    %v545 = vadd.f32 %v266, %v298
    %v546 = vadd.f32 %v267, %v299
    %v547 = vld [vmem:[#allocation14] sm:$0xff]
    %v548 = vld [vmem:[#allocation14 + $0x8] sm:$0xff]
    %v550 = vsel %vm302, %v531, 0
    %v553 = vsel %vm302, %v532, 0
    %v556 = vsel %vm302, %v533, 0
    %v559 = vsel %vm302, %v534, 0
    %v562 = vsel %vm302, %v535, 0
    %v565 = vsel %vm302, %v536, 0
    %v568 = vsel %vm302, %v537, 0
    %v571 = vsel %vm302, %v538, 0
    %v574 = vsel %vm302, %v539, 0
    %v577 = vsel %vm302, %v540, 0
    %v580 = vsel %vm302, %v541, 0
    %v583 = vsel %vm302, %v542, 0
    %v586 = vsel %vm302, %v543, 0
    %v589 = vsel %vm302, %v544, 0
    %v592 = vsel %vm302, %v545, 0
    %v595 = vsel %vm302, %v546, 0
    %597 = vmatpush.msra.mxu0 0.0
    %598 = vmatpush.msra.mxu0 0.0
    %599 = vmatpush.msra.mxu0 0.0
    %600 = vmatpush.msra.mxu0 0.0
    %601 = vmatpush.msra.mxu0 0.0
    %602 = vmatpush.msra.mxu0 0.0
    %603 = vmatpush.msra.mxu0 0.0
    %604 = vmatpush.msra.mxu0 0.0
    %605 = vmatpush.msra.mxu0 0.0
    %606 = vmatpush.msra.mxu0 0.0
    %607 = vmatpush.msra.mxu0 0.0
    %608 = vmatpush.msra.mxu0 0.0
    %609 = vmatpush.msra.mxu0 0.0
    %610 = vmatpush.msra.mxu0 0.0
    %611 = vmatpush.msra.mxu0 %v548
    %612 = vmatpush.msra.mxu0 %v547
    %613 = vmatmul.f32.gmra.mxu0 %v550
    %v614 = vpop.f32.mrf.mxu0
    %v615 = vadd.f32 0.0, %v614
    %616 = vmatmul.f32.gmra.mxu0 %v553
    %v617 = vpop.f32.mrf.mxu0
    %v618 = vadd.f32 0.0, %v617
    %619 = vmatmul.f32.gmra.mxu0 %v556
    %v620 = vpop.f32.mrf.mxu0
    %v621 = vadd.f32 0.0, %v620
    %622 = vmatmul.f32.gmra.mxu0 %v559
    %v623 = vpop.f32.mrf.mxu0
    %v624 = vadd.f32 0.0, %v623
    %625 = vmatmul.f32.gmra.mxu0 %v562
    %v626 = vpop.f32.mrf.mxu0
    %v627 = vadd.f32 0.0, %v626
    %628 = vmatmul.f32.gmra.mxu0 %v565
    %v629 = vpop.f32.mrf.mxu0
    %v630 = vadd.f32 0.0, %v629
    %631 = vmatmul.f32.gmra.mxu0 %v568
    %v632 = vpop.f32.mrf.mxu0
    %v633 = vadd.f32 0.0, %v632
    %634 = vmatmul.f32.gmra.mxu0 %v571
    %v635 = vpop.f32.mrf.mxu0
    %v636 = vadd.f32 0.0, %v635
    %637 = vmatmul.f32.gmra.mxu0 %v574
    %v638 = vpop.f32.mrf.mxu0
    %v639 = vadd.f32 0.0, %v638
    %640 = vmatmul.f32.gmra.mxu0 %v577
    %v641 = vpop.f32.mrf.mxu0
    %v642 = vadd.f32 0.0, %v641
    %643 = vmatmul.f32.gmra.mxu0 %v580
    %v644 = vpop.f32.mrf.mxu0
    %v645 = vadd.f32 0.0, %v644
    %646 = vmatmul.f32.gmra.mxu0 %v583
    %v647 = vpop.f32.mrf.mxu0
    %v648 = vadd.f32 0.0, %v647
    %649 = vmatmul.f32.gmra.mxu0 %v586
    %v650 = vpop.f32.mrf.mxu0
    %v651 = vadd.f32 0.0, %v650
    %652 = vmatmul.f32.gmra.mxu0 %v589
    %v653 = vpop.f32.mrf.mxu0
    %v654 = vadd.f32 0.0, %v653
    %655 = vmatmul.f32.gmra.mxu0 %v592
    %v656 = vpop.f32.mrf.mxu0
    %v657 = vadd.f32 0.0, %v656
    %658 = vmatmul.f32.gmra.mxu0 %v595
    %v659 = vpop.f32.mrf.mxu0
    %v660 = vadd.f32 0.0, %v659
    %661 = vdwg.mxu0
    %v662 = vadd.f32 %v369, %v484
    %v663 = vadd.f32 %v372, %v487
    %v664 = vadd.f32 %v375, %v490
    %v665 = vadd.f32 %v378, %v493
    %v666 = vadd.f32 %v381, %v496
    %v667 = vadd.f32 %v384, %v499
    %v668 = vadd.f32 %v387, %v502
    %v669 = vadd.f32 %v390, %v505
    %v670 = vadd.f32 %v393, %v508
    %v671 = vadd.f32 %v396, %v511
    %v672 = vadd.f32 %v399, %v514
    %v673 = vadd.f32 %v402, %v517
    %v674 = vadd.f32 %v405, %v520
    %v675 = vadd.f32 %v408, %v523
    %v676 = vadd.f32 %v411, %v526
    %v677 = vadd.f32 %v414, %v529
    %v678 = vsub.f32 %v615, %v369
    %v679 = vsub.f32 %v618, %v372
    %v680 = vsub.f32 %v621, %v375
    %v681 = vsub.f32 %v624, %v378
    %v682 = vsub.f32 %v627, %v381
    %v683 = vsub.f32 %v630, %v384
    %v684 = vsub.f32 %v633, %v387
    %v685 = vsub.f32 %v636, %v390
    %v686 = vsub.f32 %v639, %v393
    %v687 = vsub.f32 %v642, %v396
    %v688 = vsub.f32 %v645, %v399
    %v689 = vsub.f32 %v648, %v402
    %v690 = vsub.f32 %v651, %v405
    %v691 = vsub.f32 %v654, %v408
    %v692 = vsub.f32 %v657, %v411
    %v693 = vsub.f32 %v660, %v414
    %v694 = vadd.f32 %v678, %v484
    %v695 = vadd.f32 %v679, %v487
    %v696 = vadd.f32 %v680, %v490
    %v697 = vadd.f32 %v681, %v493
    %v698 = vadd.f32 %v682, %v496
    %v699 = vadd.f32 %v683, %v499
    %v700 = vadd.f32 %v684, %v502
    %v701 = vadd.f32 %v685, %v505
    %v702 = vadd.f32 %v686, %v508
    %v703 = vadd.f32 %v687, %v511
    %v704 = vadd.f32 %v688, %v514
    %v705 = vadd.f32 %v689, %v517
    %v706 = vadd.f32 %v690, %v520
    %v707 = vadd.f32 %v691, %v523
    %v708 = vadd.f32 %v692, %v526
    %v709 = vadd.f32 %v693, %v529
    %v710 = vmul.f32 %v662, %v662
    %v711 = vmul.f32 %v663, %v663
    %v712 = vmul.f32 %v664, %v664
    %v713 = vmul.f32 %v665, %v665
    %v714 = vmul.f32 %v666, %v666
    %v715 = vmul.f32 %v667, %v667
    %v716 = vmul.f32 %v668, %v668
    %v717 = vmul.f32 %v669, %v669
    %v718 = vmul.f32 %v670, %v670
    %v719 = vmul.f32 %v671, %v671
    %v720 = vmul.f32 %v672, %v672
    %v721 = vmul.f32 %v673, %v673
    %v722 = vmul.f32 %v674, %v674
    %v723 = vmul.f32 %v675, %v675
    %v724 = vmul.f32 %v676, %v676
    %v725 = vmul.f32 %v677, %v677
    %v726 = vmul.f32 %v694, %v694
    %v727 = vmul.f32 %v695, %v695
    %v728 = vmul.f32 %v696, %v696
    %v729 = vmul.f32 %v697, %v697
    %v730 = vmul.f32 %v698, %v698
    %v731 = vmul.f32 %v699, %v699
    %v732 = vmul.f32 %v700, %v700
    %v733 = vmul.f32 %v701, %v701
    %v734 = vmul.f32 %v702, %v702
    %v735 = vmul.f32 %v703, %v703
    %v736 = vmul.f32 %v704, %v704
    %v737 = vmul.f32 %v705, %v705
    %v738 = vmul.f32 %v706, %v706
    %v739 = vmul.f32 %v707, %v707
    %v740 = vmul.f32 %v708, %v708
    %v741 = vmul.f32 %v709, %v709
    %v742 = vadd.f32 %v710, %v726
    %v743 = vadd.f32 %v711, %v727
    %v744 = vadd.f32 %v712, %v728
    %v745 = vadd.f32 %v713, %v729
    %v746 = vadd.f32 %v714, %v730
    %v747 = vadd.f32 %v715, %v731
    %v748 = vadd.f32 %v716, %v732
    %v749 = vadd.f32 %v717, %v733
    %v750 = vadd.f32 %v718, %v734
    %v751 = vadd.f32 %v719, %v735
    %v752 = vadd.f32 %v720, %v736
    %v753 = vadd.f32 %v721, %v737
    %v754 = vadd.f32 %v722, %v738
    %v755 = vadd.f32 %v723, %v739
    %v756 = vadd.f32 %v724, %v740
    %v757 = vadd.f32 %v725, %v741
    %v758 = vrsqrt.pop %v742
    %v759 = vmul.f32 %v758, %v742
    %v760 = vmul.f32 %v759, %v758
    %v761 = vmul.f32 0.5, %v760
    %v762 = vsub.f32 1.5, %v761
    %v763 = vmul.f32 %v758, %v762
    %v764 = vmul.f32 %v742, %v763
    %vm765 = vcmp.eq.f32.partialorder %v742, inf
    %v766 = vsel %vm765, %v742, %v764
    %vm767 = vcmp.eq.f32.partialorder %v742, 0.0
    %v768 = vand.u32 %v742, 2147483648
    %v769 = vsel %vm767, %v768, %v766
    %v770 = vrsqrt.pop %v743
    %v771 = vmul.f32 %v770, %v743
    %v772 = vmul.f32 %v771, %v770
    %v773 = vmul.f32 0.5, %v772
    %v774 = vsub.f32 1.5, %v773
    %v775 = vmul.f32 %v770, %v774
    %v776 = vmul.f32 %v743, %v775
    %vm777 = vcmp.eq.f32.partialorder %v743, inf
    %v778 = vsel %vm777, %v743, %v776
    %vm779 = vcmp.eq.f32.partialorder %v743, 0.0
    %v780 = vand.u32 %v743, 2147483648
    %v781 = vsel %vm779, %v780, %v778
    %v782 = vrsqrt.pop %v744
    %v783 = vmul.f32 %v782, %v744
    %v784 = vmul.f32 %v783, %v782
    %v785 = vmul.f32 0.5, %v784
    %v786 = vsub.f32 1.5, %v785
    %v787 = vmul.f32 %v782, %v786
    %v788 = vmul.f32 %v744, %v787
    %vm789 = vcmp.eq.f32.partialorder %v744, inf
    %v790 = vsel %vm789, %v744, %v788
    %vm791 = vcmp.eq.f32.partialorder %v744, 0.0
    %v792 = vand.u32 %v744, 2147483648
    %v793 = vsel %vm791, %v792, %v790
    %v794 = vrsqrt.pop %v745
    %v795 = vmul.f32 %v794, %v745
    %v796 = vmul.f32 %v795, %v794
    %v797 = vmul.f32 0.5, %v796
    %v798 = vsub.f32 1.5, %v797
    %v799 = vmul.f32 %v794, %v798
    %v800 = vmul.f32 %v745, %v799
    %vm801 = vcmp.eq.f32.partialorder %v745, inf
    %v802 = vsel %vm801, %v745, %v800
    %vm803 = vcmp.eq.f32.partialorder %v745, 0.0
    %v804 = vand.u32 %v745, 2147483648
    %v805 = vsel %vm803, %v804, %v802
    %v806 = vrsqrt.pop %v746
    %v807 = vmul.f32 %v806, %v746
    %v808 = vmul.f32 %v807, %v806
    %v809 = vmul.f32 0.5, %v808
    %v810 = vsub.f32 1.5, %v809
    %v811 = vmul.f32 %v806, %v810
    %v812 = vmul.f32 %v746, %v811
    %vm813 = vcmp.eq.f32.partialorder %v746, inf
    %v814 = vsel %vm813, %v746, %v812
    %vm815 = vcmp.eq.f32.partialorder %v746, 0.0
    %v816 = vand.u32 %v746, 2147483648
    %v817 = vsel %vm815, %v816, %v814
    %v818 = vrsqrt.pop %v747
    %v819 = vmul.f32 %v818, %v747
    %v820 = vmul.f32 %v819, %v818
    %v821 = vmul.f32 0.5, %v820
    %v822 = vsub.f32 1.5, %v821
    %v823 = vmul.f32 %v818, %v822
    %v824 = vmul.f32 %v747, %v823
    %vm825 = vcmp.eq.f32.partialorder %v747, inf
    %v826 = vsel %vm825, %v747, %v824
    %vm827 = vcmp.eq.f32.partialorder %v747, 0.0
    %v828 = vand.u32 %v747, 2147483648
    %v829 = vsel %vm827, %v828, %v826
    %v830 = vrsqrt.pop %v748
    %v831 = vmul.f32 %v830, %v748
    %v832 = vmul.f32 %v831, %v830
    %v833 = vmul.f32 0.5, %v832
    %v834 = vsub.f32 1.5, %v833
    %v835 = vmul.f32 %v830, %v834
    %v836 = vmul.f32 %v748, %v835
    %vm837 = vcmp.eq.f32.partialorder %v748, inf
    %v838 = vsel %vm837, %v748, %v836
    %vm839 = vcmp.eq.f32.partialorder %v748, 0.0
    %v840 = vand.u32 %v748, 2147483648
    %v841 = vsel %vm839, %v840, %v838
    %v842 = vrsqrt.pop %v749
    %v843 = vmul.f32 %v842, %v749
    %v844 = vmul.f32 %v843, %v842
    %v845 = vmul.f32 0.5, %v844
    %v846 = vsub.f32 1.5, %v845
    %v847 = vmul.f32 %v842, %v846
    %v848 = vmul.f32 %v749, %v847
    %vm849 = vcmp.eq.f32.partialorder %v749, inf
    %v850 = vsel %vm849, %v749, %v848
    %vm851 = vcmp.eq.f32.partialorder %v749, 0.0
    %v852 = vand.u32 %v749, 2147483648
    %v853 = vsel %vm851, %v852, %v850
    %v854 = vrsqrt.pop %v750
    %v855 = vmul.f32 %v854, %v750
    %v856 = vmul.f32 %v855, %v854
    %v857 = vmul.f32 0.5, %v856
    %v858 = vsub.f32 1.5, %v857
    %v859 = vmul.f32 %v854, %v858
    %v860 = vmul.f32 %v750, %v859
    %vm861 = vcmp.eq.f32.partialorder %v750, inf
    %v862 = vsel %vm861, %v750, %v860
    %vm863 = vcmp.eq.f32.partialorder %v750, 0.0
    %v864 = vand.u32 %v750, 2147483648
    %v865 = vsel %vm863, %v864, %v862
    %v866 = vrsqrt.pop %v751
    %v867 = vmul.f32 %v866, %v751
    %v868 = vmul.f32 %v867, %v866
    %v869 = vmul.f32 0.5, %v868
    %v870 = vsub.f32 1.5, %v869
    %v871 = vmul.f32 %v866, %v870
    %v872 = vmul.f32 %v751, %v871
    %vm873 = vcmp.eq.f32.partialorder %v751, inf
    %v874 = vsel %vm873, %v751, %v872
    %vm875 = vcmp.eq.f32.partialorder %v751, 0.0
    %v876 = vand.u32 %v751, 2147483648
    %v877 = vsel %vm875, %v876, %v874
    %v878 = vrsqrt.pop %v752
    %v879 = vmul.f32 %v878, %v752
    %v880 = vmul.f32 %v879, %v878
    %v881 = vmul.f32 0.5, %v880
    %v882 = vsub.f32 1.5, %v881
    %v883 = vmul.f32 %v878, %v882
    %v884 = vmul.f32 %v752, %v883
    %vm885 = vcmp.eq.f32.partialorder %v752, inf
    %v886 = vsel %vm885, %v752, %v884
    %vm887 = vcmp.eq.f32.partialorder %v752, 0.0
    %v888 = vand.u32 %v752, 2147483648
    %v889 = vsel %vm887, %v888, %v886
    %v890 = vrsqrt.pop %v753
    %v891 = vmul.f32 %v890, %v753
    %v892 = vmul.f32 %v891, %v890
    %v893 = vmul.f32 0.5, %v892
    %v894 = vsub.f32 1.5, %v893
    %v895 = vmul.f32 %v890, %v894
    %v896 = vmul.f32 %v753, %v895
    %vm897 = vcmp.eq.f32.partialorder %v753, inf
    %v898 = vsel %vm897, %v753, %v896
    %vm899 = vcmp.eq.f32.partialorder %v753, 0.0
    %v900 = vand.u32 %v753, 2147483648
    %v901 = vsel %vm899, %v900, %v898
    %v902 = vrsqrt.pop %v754
    %v903 = vmul.f32 %v902, %v754
    %v904 = vmul.f32 %v903, %v902
    %v905 = vmul.f32 0.5, %v904
    %v906 = vsub.f32 1.5, %v905
    %v907 = vmul.f32 %v902, %v906
    %v908 = vmul.f32 %v754, %v907
    %vm909 = vcmp.eq.f32.partialorder %v754, inf
    %v910 = vsel %vm909, %v754, %v908
    %vm911 = vcmp.eq.f32.partialorder %v754, 0.0
    %v912 = vand.u32 %v754, 2147483648
    %v913 = vsel %vm911, %v912, %v910
    %v914 = vrsqrt.pop %v755
    %v915 = vmul.f32 %v914, %v755
    %v916 = vmul.f32 %v915, %v914
    %v917 = vmul.f32 0.5, %v916
    %v918 = vsub.f32 1.5, %v917
    %v919 = vmul.f32 %v914, %v918
    %v920 = vmul.f32 %v755, %v919
    %vm921 = vcmp.eq.f32.partialorder %v755, inf
    %v922 = vsel %vm921, %v755, %v920
    %vm923 = vcmp.eq.f32.partialorder %v755, 0.0
    %v924 = vand.u32 %v755, 2147483648
    %v925 = vsel %vm923, %v924, %v922
    %v926 = vrsqrt.pop %v756
    %v927 = vmul.f32 %v926, %v756
    %v928 = vmul.f32 %v927, %v926
    %v929 = vmul.f32 0.5, %v928
    %v930 = vsub.f32 1.5, %v929
    %v931 = vmul.f32 %v926, %v930
    %v932 = vmul.f32 %v756, %v931
    %vm933 = vcmp.eq.f32.partialorder %v756, inf
    %v934 = vsel %vm933, %v756, %v932
    %vm935 = vcmp.eq.f32.partialorder %v756, 0.0
    %v936 = vand.u32 %v756, 2147483648
    %v937 = vsel %vm935, %v936, %v934
    %v938 = vrsqrt.pop %v757
    %v939 = vmul.f32 %v938, %v757
    %v940 = vmul.f32 %v939, %v938
    %v941 = vmul.f32 0.5, %v940
    %v942 = vsub.f32 1.5, %v941
    %v943 = vmul.f32 %v938, %v942
    %v944 = vmul.f32 %v757, %v943
    %vm945 = vcmp.eq.f32.partialorder %v757, inf
    %v946 = vsel %vm945, %v757, %v944
    %vm947 = vcmp.eq.f32.partialorder %v757, 0.0
    %v948 = vand.u32 %v757, 2147483648
    %v949 = vsel %vm947, %v948, %v946
    %v950 = vld [vmem:[#allocation2] sm:$0xff]
    %v951 = vsel %vm302, %v769, 0.0
    %v952 = vsel %vm302, %v781, 0.0
    %v953 = vadd.f32 %v951, %v952
    %v954 = vsel %vm302, %v793, 0.0
    %v955 = vadd.f32 %v953, %v954
    %v956 = vsel %vm302, %v805, 0.0
    %v957 = vadd.f32 %v955, %v956
    %v958 = vsel %vm302, %v817, 0.0
    %v959 = vadd.f32 %v957, %v958
    %v960 = vsel %vm302, %v829, 0.0
    %v961 = vadd.f32 %v959, %v960
    %v962 = vsel %vm302, %v841, 0.0
    %v963 = vadd.f32 %v961, %v962
    %v964 = vsel %vm302, %v853, 0.0
    %v965 = vadd.f32 %v963, %v964
    %v966 = vsel %vm302, %v865, 0.0
    %v967 = vadd.f32 %v965, %v966
    %v968 = vsel %vm302, %v877, 0.0
    %v969 = vadd.f32 %v967, %v968
    %v970 = vsel %vm302, %v889, 0.0
    %v971 = vadd.f32 %v969, %v970
    %v972 = vsel %vm302, %v901, 0.0
    %v973 = vadd.f32 %v971, %v972
    %v974 = vsel %vm302, %v913, 0.0
    %v975 = vadd.f32 %v973, %v974
    %v976 = vsel %vm302, %v925, 0.0
    %v977 = vadd.f32 %v975, %v976
    %v978 = vsel %vm302, %v937, 0.0
    %v979 = vadd.f32 %v977, %v978
    %v980 = vsel %vm302, %v949, 0.0
    %v981 = vadd.f32 %v979, %v980
    %v982 = vadd.f32 %v950, %v981
    %983 = vst.msk [vmem:[#allocation2] sm:$0xff] %vm302, %v982
    // Predicated region
    $region62: #{tpu_custom_call.1} parent=1 // pred_check
      %p984 = pneg %p146
    $region63: #{tpu_custom_call.1} parent=1 // pred_check_branch
      %986 = sbr.rel (%p984) target = $region65
    $region64: #{tpu_custom_call.1} parent=1 // pred_region
      %v987 = vld [vmem:[#allocation2] sm:$0xff]
      %v988 = vsel %vm302, %v987, 0.0
      %989 = vadd.xlane.f32.xlu0 %v988
      %v990 = vpop.xlane.xlu0 %989
      %v991 = vrot.slane %v990, 4
      %v992 = vadd.f32 %v990, %v991
      %v993 = vrot.slane %v992, 2
      %v994 = vadd.f32 %v992, %v993
      %v995 = vrot.slane %v994, 1
      %v996 = vadd.f32 %v994, %v995
      %s997 = vtos %v996
      %s998 = scalar_lea.smem [#allocation15], 0
      %999 = sst [smem:[%s998]] %s997
    $region65: #{tpu_custom_call.1} parent=1 // pred_fallthru
      _
    // Predicated region
    $region66: #{tpu_custom_call.1} parent=1 // pred_check
      _
    $region67: #{tpu_custom_call.1} parent=1 // pred_check_branch
      %1001 = sbr.rel (0) target = $region69
    $region68: #{tpu_custom_call.1} parent=1 // pred_region
      %1003 = vsyncadd [#allocation5], 0
      %s1005 = sshll.u32 %s7, 4
      %s1006 = int_to_ptr.hbm [resolvable:$true] %s1005
      %1008 = dma.smem_to_hbm [#allocation15], 16, %s1006, [#allocation5]
    $region69: #{tpu_custom_call.1} parent=1 // pred_fallthru
      _
    // Predicated region
    $region70: #{tpu_custom_call.1} parent=1 // pred_check
      _
    $region71: #{tpu_custom_call.1} parent=1 // pred_check_branch
      %1010 = sbr.rel (0) target = $region73
    $region72: #{tpu_custom_call.1} parent=1 // pred_region
      %1012 = dma.done [#allocation5], 16
    $region73: #{tpu_custom_call.1} parent=1 // pred_fallthru
      _
    %1013 = sfence
    %1014 = vsyncpa [#allocation4], 1
    %1015 = vsyncpa [#allocation7], 1
    %1016 = vsyncpa [#allocation10], 1
    %1017 = vsyncpa [#allocation13], 1
    %1018 = vsyncpa [#allocation5], 1

</llo_original>
